<compile_context>
chip_gen: v6e
topology: v6e:2x2x1
jax: 0.10.0
libtpu: 0.0.40
codegen_flags: <defaults>
</compile_context>

<pallas_src>
import functools

import jax
import jax.numpy as jnp
from jax.experimental import pallas as pl
from jax.experimental.pallas import tpu as pltpu


def _round_up(x, m):
    return (x + m - 1) // m * m


def _tpu_generation():
    try:
        kind = jax.devices()[0].device_kind.lower()
    except Exception:
        return None
    for g in ("v7", "v6", "v5", "v4", "v3", "v2"):
        if g in kind:
            return g
    return None


def _colorize_kernel_fused(w_ref, b_ref, x_ref, o_ref, *, hwp):
    """Whole HW row fits one lane tile: unroll the 3 channels in-kernel.

    w_ref, b_ref: SMEM f32[3]; x_ref: VMEM (tbk, hwp); o_ref: VMEM (tbk, 3*hwp).
    """
    x = x_ref[...].astype(jnp.float32)        # f32 compute (v5e has no bf16 VPU/EUP)
    for c in range(3):                        # static unroll; lane-dense channel slabs
        z = w_ref[c] * x + b_ref[c]
        # sigmoid(z) == 0.5*tanh(0.5*z) + 0.5 : single EUP push instead of exp+recip.
        y = 0.5 * jnp.tanh(0.5 * z) + 0.5
        o_ref[:, pl.ds(c * hwp, hwp)] = y.astype(o_ref.dtype)


def _colorize_kernel_split(w_ref, b_ref, x_ref, o_ref):
    """(tbk, thw) tile for channel c = program_id(2); input DMA reused across c."""
    c = pl.program_id(2)
    x = x_ref[...].astype(jnp.float32)
    z = w_ref[c] * x + b_ref[c]
    o_ref[...] = (0.5 * jnp.tanh(0.5 * z) + 0.5).astype(o_ref.dtype)


def learnable_colorizer(heatmap, weight, bias, *, out_dtype=None,
                        max_tile_hw=16384, vmem_budget_bytes=None,
                        vmem_limit_bytes=None):
    """heatmap: (B, K, H, W); weight: (3, 1, 1, 1); bias: (3,) -> (B, K, 3, H, W)."""
    B, K, H, W = heatmap.shape
    BK, HW = B * K, H * W
    out_dtype = jnp.dtype(out_dtype) if out_dtype is not None else heatmap.dtype

    gen = _tpu_generation()
    is_v7 = gen == "v7"
    if vmem_budget_bytes is None:
        # v7x: 64 MiB physical VMEM/TC -> keep headroom; v5e/v6e: 128 MiB physical.
        vmem_budget_bytes = (24 << 20) if (is_v7 or gen is None) else (40 << 20)
    if vmem_limit_bytes is None:
        vmem_limit_bytes = (48 << 20) if (is_v7 or gen is None) else (100 << 20)

    in_bytes = jnp.dtype(heatmap.dtype).itemsize
    out_bytes = jnp.dtype(out_dtype).itemsize
    # Sublane packing of the narrower dtype: f32 -> 8, bf16 -> 16, int8/fp8 -> 32.
    sub = 32 // min(in_bytes, out_bytes)

    # ---- balanced lane tiling: multiple of 128, minimal padding ----
    hw_aligned = _round_up(HW, 128)
    n_hw = pl.cdiv(hw_aligned, max_tile_hw)
    thw = _round_up(pl.cdiv(hw_aligned, n_hw), 128)
    HWp = n_hw * thw
    fused = n_hw == 1          # whole HW row in one tile -> drop the channel grid axis

    # ---- sublane tiling sized against the double-buffered pipeline footprint ----
    if fused:
        per_row = 2 * thw * in_bytes + 2 * 3 * thw * out_bytes
    else:
        per_row = 2 * thw * (in_bytes + out_bytes)
    tbk = max(sub, (vmem_budget_bytes // per_row) // sub * sub)
    if tbk >= BK or BK < sub:
        tbk = BK                                        # full-dim block (always legal)
    n_bk = pl.cdiv(BK, tbk)
    # v7x megacore: ensure >= 2 parallel grid units so both TensorCores get work.
    if is_v7 and n_bk * n_hw < 2 and BK >= 2 * sub:
        tbk = _round_up(pl.cdiv(BK, 2), sub)
        n_bk = pl.cdiv(BK, tbk)

    x = heatmap.reshape(BK, HW)                         # contiguous -> free
    if HWp != HW:
        # TODO(synk): spatial sizes with H*W % 128 != 0 pay one pad copy (and an output
        # slice); 128-aligned sizes (e.g. 224x224) stay on the zero-copy path.
        x = jnp.pad(x, ((0, 0), (0, HWp - HW)))
    w = weight.reshape(3).astype(jnp.float32)
    b = bias.reshape(3).astype(jnp.float32)

    cost = pl.CostEstimate(
        flops=15 * BK * HWp,
        transcendentals=3 * BK * HWp,
        bytes_accessed=BK * HWp * in_bytes + 3 * BK * HWp * out_bytes,
    )
    cparams = pltpu.CompilerParams(
        dimension_semantics=("parallel",) if fused
        else ("parallel", "parallel", "arbitrary"),
        vmem_limit_bytes=vmem_limit_bytes,
    )
    smem_spec = pl.BlockSpec(memory_space=pltpu.MemorySpace.SMEM)

    if fused:
        out = pl.pallas_call(
            functools.partial(_colorize_kernel_fused, hwp=HWp),
            out_shape=jax.ShapeDtypeStruct((BK, 3 * HWp), out_dtype),
            grid=(n_bk,),
            in_specs=[smem_spec, smem_spec,
                      pl.BlockSpec((tbk, HWp), lambda i: (i, 0))],
            out_specs=pl.BlockSpec((tbk, 3 * HWp), lambda i: (i, 0)),
            compiler_params=cparams,
            cost_estimate=cost,
        )(w, b, x)
    else:
        out = pl.pallas_call(
            _colorize_kernel_split,
            out_shape=jax.ShapeDtypeStruct((BK, 3 * HWp), out_dtype),
            grid=(n_bk, n_hw, 3),
            in_specs=[smem_spec, smem_spec,
                      # Input block index ignores c -> one DMA per (i, j), reused x3.
                      pl.BlockSpec((tbk, thw), lambda i, j, c: (i, j))],
            # Channel-contiguous output slabs on the (BK, 3*HWp) array.
            out_specs=pl.BlockSpec((tbk, thw), lambda i, j, c: (i, c * n_hw + j)),
            compiler_params=cparams,
            cost_estimate=cost,
        )(w, b, x)

    if HWp == HW:
        return out.reshape(B, K, 3, H, W)               # contiguous -> free
    return out.reshape(BK, 3, HWp)[:, :, :HW].reshape(B, K, 3, H, W)


if __name__ == "__main__":
    key = jax.random.PRNGKey(0)
    k_x, k_w, k_b = jax.random.split(key, 3)

    B, K, H, W = 2, 4, 16, 16
    heatmap = jax.random.normal(k_x, (B, K, H, W), dtype=jnp.float32)

    # Deterministic Conv2d(1, 3, kernel_size=1) parameters: weight (3,1,1,1), bias (3,)
    # (uniform in [-1, 1], matching the fan_in=1 PyTorch init range).
    weight = jax.random.uniform(k_w, (3, 1, 1, 1), jnp.float32, -1.0, 1.0)
    bias = jax.random.uniform(k_b, (3,), jnp.float32, -1.0, 1.0)

    # Pure-JAX reference of the same math.
    ref = jax.nn.sigmoid(
        heatmap[:, :, None, :, :] * weight.reshape(1, 1, 3, 1, 1)
        + bias.reshape(1, 1, 3, 1, 1)
    )

    # Fused path (whole HW row in one lane tile, the common small-heatmap case).
    out = jax.block_until_ready(learnable_colorizer(heatmap, weight, bias))
    assert out.shape == (B, K, 3, H, W), out.shape
    assert jnp.allclose(out, ref, atol=1e-5, rtol=1e-5)

    # Channel-split path (force multiple HW tiles) exercised for coverage.
    out2 = jax.block_until_ready(
        learnable_colorizer(heatmap, weight, bias, max_tile_hw=128))
    assert out2.shape == (B, K, 3, H, W), out2.shape
    assert jnp.allclose(out2, ref, atol=1e-5, rtol=1e-5)

    print("KERNEL_OK")
</pallas_src>

<mosaic_0001>
module attributes {stable_mosaic.version = 11 : i64} {
  func.func @_colorize_kernel_fused(%arg0: i32, %arg1: memref<3xf32, #tpu.memory_space<smem>>, %arg2: memref<3xf32, #tpu.memory_space<smem>>, %arg3: memref<8x256xf32, #tpu.memory_space<vmem>>, %arg4: memref<8x768xf32, #tpu.memory_space<vmem>>) attributes {dimension_semantics = [#tpu.dimension_semantics<parallel>], iteration_bounds = array<i64: 1>, scalar_prefetch = 0 : i64, scratch_operands = 0 : i64, tpu.core_type = #tpu.core_type<tc>, window_params = [{transform_indices = @transform_0, window_bounds = array<i64: 3>}, {transform_indices = @transform_1, window_bounds = array<i64: 3>}, {transform_indices = @transform_2, window_bounds = array<i64: 8, 256>}, {transform_indices = @transform_3, window_bounds = array<i64: 8, 768>}]} {
    %c0 = arith.constant 0 : index
    %c0_0 = arith.constant 0 : index
    %0 = vector.load %arg3[%c0, %c0_0] : memref<8x256xf32, #tpu.memory_space<vmem>>, vector<8x256xf32>
    %c0_1 = arith.constant 0 : index
    %1 = memref.load %arg1[%c0_1] : memref<3xf32, #tpu.memory_space<smem>>
    %2 = vector.broadcast %1 : f32 to vector<8x256xf32>
    %3 = arith.mulf %2, %0 : vector<8x256xf32>
    %c0_2 = arith.constant 0 : index
    %4 = memref.load %arg2[%c0_2] : memref<3xf32, #tpu.memory_space<smem>>
    %5 = vector.broadcast %4 : f32 to vector<8x256xf32>
    %6 = arith.addf %3, %5 : vector<8x256xf32>
    %cst = arith.constant 5.000000e-01 : f32
    %7 = vector.broadcast %cst : f32 to vector<8x256xf32>
    %8 = arith.mulf %7, %6 : vector<8x256xf32>
    %9 = math.tanh %8 : vector<8x256xf32>
    %cst_3 = arith.constant 5.000000e-01 : f32
    %10 = vector.broadcast %cst_3 : f32 to vector<8x256xf32>
    %11 = arith.mulf %10, %9 : vector<8x256xf32>
    %cst_4 = arith.constant 5.000000e-01 : f32
    %12 = vector.broadcast %cst_4 : f32 to vector<8x256xf32>
    %13 = arith.addf %11, %12 : vector<8x256xf32>
    %c0_5 = arith.constant 0 : index
    %c0_6 = arith.constant 0 : index
    %14 = vector.load %arg4[%c0_5, %c0_6] : memref<8x768xf32, #tpu.memory_space<vmem>>, vector<8x256xf32>
    tpu.vector_store %arg4[%c0_5, %c0_6], %13 {strides = array<i32>} : memref<8x768xf32, #tpu.memory_space<vmem>>, vector<8x256xf32>,
    %c1 = arith.constant 1 : index
    %15 = memref.load %arg1[%c1] : memref<3xf32, #tpu.memory_space<smem>>
    %16 = vector.broadcast %15 : f32 to vector<8x256xf32>
    %17 = arith.mulf %16, %0 : vector<8x256xf32>
    %c1_7 = arith.constant 1 : index
    %18 = memref.load %arg2[%c1_7] : memref<3xf32, #tpu.memory_space<smem>>
    %19 = vector.broadcast %18 : f32 to vector<8x256xf32>
    %20 = arith.addf %17, %19 : vector<8x256xf32>
    %cst_8 = arith.constant 5.000000e-01 : f32
    %21 = vector.broadcast %cst_8 : f32 to vector<8x256xf32>
    %22 = arith.mulf %21, %20 : vector<8x256xf32>
    %23 = math.tanh %22 : vector<8x256xf32>
    %cst_9 = arith.constant 5.000000e-01 : f32
    %24 = vector.broadcast %cst_9 : f32 to vector<8x256xf32>
    %25 = arith.mulf %24, %23 : vector<8x256xf32>
    %cst_10 = arith.constant 5.000000e-01 : f32
    %26 = vector.broadcast %cst_10 : f32 to vector<8x256xf32>
    %27 = arith.addf %25, %26 : vector<8x256xf32>
    %c0_11 = arith.constant 0 : index
    %c256 = arith.constant 256 : index
    %28 = vector.load %arg4[%c0_11, %c256] : memref<8x768xf32, #tpu.memory_space<vmem>>, vector<8x256xf32>
    tpu.vector_store %arg4[%c0_11, %c256], %27 {strides = array<i32>} : memref<8x768xf32, #tpu.memory_space<vmem>>, vector<8x256xf32>,
    %c2 = arith.constant 2 : index
    %29 = memref.load %arg1[%c2] : memref<3xf32, #tpu.memory_space<smem>>
    %30 = vector.broadcast %29 : f32 to vector<8x256xf32>
    %31 = arith.mulf %30, %0 : vector<8x256xf32>
    %c2_12 = arith.constant 2 : index
    %32 = memref.load %arg2[%c2_12] : memref<3xf32, #tpu.memory_space<smem>>
    %33 = vector.broadcast %32 : f32 to vector<8x256xf32>
    %34 = arith.addf %31, %33 : vector<8x256xf32>
    %cst_13 = arith.constant 5.000000e-01 : f32
    %35 = vector.broadcast %cst_13 : f32 to vector<8x256xf32>
    %36 = arith.mulf %35, %34 : vector<8x256xf32>
    %37 = math.tanh %36 : vector<8x256xf32>
    %cst_14 = arith.constant 5.000000e-01 : f32
    %38 = vector.broadcast %cst_14 : f32 to vector<8x256xf32>
    %39 = arith.mulf %38, %37 : vector<8x256xf32>
    %cst_15 = arith.constant 5.000000e-01 : f32
    %40 = vector.broadcast %cst_15 : f32 to vector<8x256xf32>
    %41 = arith.addf %39, %40 : vector<8x256xf32>
    %c0_16 = arith.constant 0 : index
    %c512 = arith.constant 512 : index
    %42 = vector.load %arg4[%c0_16, %c512] : memref<8x768xf32, #tpu.memory_space<vmem>>, vector<8x256xf32>
    tpu.vector_store %arg4[%c0_16, %c512], %41 {strides = array<i32>} : memref<8x768xf32, #tpu.memory_space<vmem>>, vector<8x256xf32>,
    return
  }
  func.func @transform_0(%arg0: i32) -> i32 {
    %c0_i32 = arith.constant 0 : i32
    %c0_i32_0 = arith.constant 0 : i32
    return %c0_i32 : i32
  }
  func.func @transform_1(%arg0: i32) -> i32 {
    %c0_i32 = arith.constant 0 : i32
    %c0_i32_0 = arith.constant 0 : i32
    return %c0_i32 : i32
  }
  func.func @transform_2(%arg0: i32) -> (i32, i32) {
    %c0_i32 = arith.constant 0 : i32
    %c0_i32_0 = arith.constant 0 : i32
    return %arg0, %c0_i32 : i32, i32
  }
  func.func @transform_3(%arg0: i32) -> (i32, i32) {
    %c0_i32 = arith.constant 0 : i32
    %c0_i32_0 = arith.constant 0 : i32
    return %arg0, %c0_i32 : i32, i32
  }
}

</mosaic_0001>

<llo_original>
// kernel: tpu_custom_call.1
$region0: #{tpu_custom_call.1}
  #allocation0 [shape = 'u32[]', space=smem, size = 0x4, offset = 0x4, fixed_abs, tag = 'smem constant byte address 0x4 - core index']
  #allocation1 [shape = 'u32[144,128]{1,0:T(1,128)}', space=vmem, size = 0x12000, scoped, tag = 'internal scratch']
  %s0 = inlined_call_operand.hbm [shape: f32[3], index: 0, kind: input, shape index: {}]
  %s1 = inlined_call_operand.vmem [shape: f32[3], index: 1, kind: input, shape index: {}]
  %s2 = inlined_call_operand.hbm [shape: f32[8,256], index: 2, kind: input, shape index: {}]
  %s3 = inlined_call_operand.hbm [shape: f32[8,768], index: 3, kind: output, shape index: {}]
  %s4 = sld [smem:[#allocation0]]
  $region34: #{tpu_custom_call.1} parent=0
    _
  %s6 = ssub.s32 1, %s4
  %s7 = scalar_select 0, %s6, %s4
  $region1: #{tpu_custom_call.1} parent=0
    #allocation2 [shape = 'u8[512]{0}', space=smem, size = 0x200, scoped, tag = 'input window, operand 0, single buffered']
    #allocation3 [shape = 's32[1]{0}', space=sflag, size = 0x4, scoped, tag = 'scoped memory for tpu_custom_call.1']
    #allocation4 [shape = 's32[1]{0}', space=sflag, size = 0x4, scoped, tag = 'scoped memory for tpu_custom_call.1']
    #allocation5 [shape = 's32[1]{0}', space=sflag, size = 0x4, scoped, tag = 'scoped memory for tpu_custom_call.1']
    #allocation6 [shape = 's32[1]{0}', space=sflag, size = 0x4, scoped, tag = 'scoped memory for tpu_custom_call.1']
    #allocation7 [shape = 'u8[512]{0}', space=smem, size = 0x200, scoped, tag = 'input window, operand 1, single buffered']
    #allocation8 [shape = 'u8[8192]{0}', space=vmem, size = 0x2000, scoped, tag = 'input window, operand 2, single buffered']
    #allocation9 [shape = 'u8[24576]{0}', space=vmem, size = 0x6000, scoped, tag = 'output window, operand 0, single buffered']
    %8 = vsyncpa [#allocation5], 0
    %9 = vsyncpa [#allocation6], 0
    %10 = vsyncpa [#allocation3], 0
    %11 = vsyncpa [#allocation4], 0
    // Predicated region
    $region2: #{tpu_custom_call.1} parent=1 // pred_check
      _
    $region3: #{tpu_custom_call.1} parent=1 // pred_check_branch
      %13 = sbr.rel (0) target = $region5
    $region4: #{tpu_custom_call.1} parent=1 // pred_region
      %s15 = ssub.s32 16, 16
      %16 = vsyncadd [#allocation5], %s15
      %19 = dma.hbm_to_smem %s0, 16, [#allocation2], [#allocation5]
    $region5: #{tpu_custom_call.1} parent=1 // pred_fallthru
      _
    // Predicated region
    $region6: #{tpu_custom_call.1} parent=1 // pred_check
      _
    $region7: #{tpu_custom_call.1} parent=1 // pred_check_branch
      %21 = sbr.rel (0) target = $region9
    $region8: #{tpu_custom_call.1} parent=1 // pred_region
      %s23 = ssub.s32 16, 16
      %24 = vsyncadd [#allocation6], %s23
      %s26 = sshll.u32 %s1, 4
      %s27 = int_to_ptr.vmem [resolvable:$true] %s26
      %29 = dma.vmem_to_smem %s27, 16, [#allocation7], [#allocation6]
    $region9: #{tpu_custom_call.1} parent=1 // pred_fallthru
      _
    // Predicated region
    $region10: #{tpu_custom_call.1} parent=1 // pred_check
      _
    $region11: #{tpu_custom_call.1} parent=1 // pred_check_branch
      %31 = sbr.rel (0) target = $region13
    $region12: #{tpu_custom_call.1} parent=1 // pred_region
      %s33 = ssub.s32 256, 256
      %34 = vsyncadd [#allocation3], %s33
      %s36 = sshll.u32 [#allocation8], 4
      %s37 = int_to_ptr.vmem [resolvable:$true] %s36
      %39 = dma.hbm_to_vmem [thread:$0]  %s2, 256, %s37, [#allocation3]
    $region13: #{tpu_custom_call.1} parent=1 // pred_fallthru
      _
    // Predicated region
    $region14: #{tpu_custom_call.1} parent=1 // pred_check
      _
    $region15: #{tpu_custom_call.1} parent=1 // pred_check_branch
      %41 = sbr.rel (0) target = $region17
    $region16: #{tpu_custom_call.1} parent=1 // pred_region
      %42 = dma.done [#allocation5], 16
    $region17: #{tpu_custom_call.1} parent=1 // pred_fallthru
      _
    // Predicated region
    $region18: #{tpu_custom_call.1} parent=1 // pred_check
      _
    $region19: #{tpu_custom_call.1} parent=1 // pred_check_branch
      %44 = sbr.rel (0) target = $region21
    $region20: #{tpu_custom_call.1} parent=1 // pred_region
      %45 = dma.done [#allocation6], 16
    $region21: #{tpu_custom_call.1} parent=1 // pred_fallthru
      _
    // Predicated region
    $region22: #{tpu_custom_call.1} parent=1 // pred_check
      _
    $region23: #{tpu_custom_call.1} parent=1 // pred_check_branch
      %47 = sbr.rel (0) target = $region25
    $region24: #{tpu_custom_call.1} parent=1 // pred_region
      %48 = dma.done [#allocation3], 256
    $region25: #{tpu_custom_call.1} parent=1 // pred_fallthru
      _
    %49 = sfence
    %v50 = vld [vmem:[#allocation8] sm:$0xff]
    %v51 = vld [vmem:[#allocation8 + $0x8] sm:$0xff]
    %s52 = sld [smem:[#allocation2]]
    %v53 = vstv %s52
    %v54 = vmul.f32 %v53, %v50
    %v55 = vmul.f32 %v53, %v51
    %s56 = sld [smem:[#allocation7]]
    %v57 = vstv %s56
    %v58 = vadd.f32 %v54, %v57
    %v59 = vadd.f32 %v55, %v57
    %v60 = vmul.f32 %v58, 0.5
    %v61 = vmul.f32 %v59, 0.5
    %v62 = vtanh.pop %v60
    %v63 = vtanh.pop %v61
    %v64 = vmul.f32 %v62, 0.5
    %v65 = vmul.f32 %v63, 0.5
    %v66 = vadd.f32 %v64, 0.5
    %v67 = vadd.f32 %v65, 0.5
    %68 = vst [vmem:[#allocation9] sm:$0xff] %v66
    %69 = vst [vmem:[#allocation9 + $0x8] sm:$0xff] %v67
    %s70 = sld [smem:[#allocation2 + $0x1]]
    %v71 = vstv %s70
    %v72 = vmul.f32 %v71, %v50
    %v73 = vmul.f32 %v71, %v51
    %s74 = sld [smem:[#allocation7 + $0x1]]
    %v75 = vstv %s74
    %v76 = vadd.f32 %v72, %v75
    %v77 = vadd.f32 %v73, %v75
    %v78 = vmul.f32 %v76, 0.5
    %v79 = vmul.f32 %v77, 0.5
    %v80 = vtanh.pop %v78
    %v81 = vtanh.pop %v79
    %v82 = vmul.f32 %v80, 0.5
    %v83 = vmul.f32 %v81, 0.5
    %v84 = vadd.f32 %v82, 0.5
    %v85 = vadd.f32 %v83, 0.5
    %86 = vst [vmem:[#allocation9 + $0x10] sm:$0xff] %v84
    %87 = vst [vmem:[#allocation9 + $0x18] sm:$0xff] %v85
    %s88 = sld [smem:[#allocation2 + $0x2]]
    %v89 = vstv %s88
    %v90 = vmul.f32 %v89, %v50
    %v91 = vmul.f32 %v89, %v51
    %s92 = sld [smem:[#allocation7 + $0x2]]
    %v93 = vstv %s92
    %v94 = vadd.f32 %v90, %v93
    %v95 = vadd.f32 %v91, %v93
    %v96 = vmul.f32 %v94, 0.5
    %v97 = vmul.f32 %v95, 0.5
    %v98 = vtanh.pop %v96
    %v99 = vtanh.pop %v97
    %v100 = vmul.f32 %v98, 0.5
    %v101 = vmul.f32 %v99, 0.5
    %v102 = vadd.f32 %v100, 0.5
    %v103 = vadd.f32 %v101, 0.5
    %104 = vst [vmem:[#allocation9 + $0x20] sm:$0xff] %v102
    %105 = vst [vmem:[#allocation9 + $0x28] sm:$0xff] %v103
    // Predicated region
    $region26: #{tpu_custom_call.1} parent=1 // pred_check
      _
    $region27: #{tpu_custom_call.1} parent=1 // pred_check_branch
      %107 = sbr.rel (0) target = $region29
    $region28: #{tpu_custom_call.1} parent=1 // pred_region
      %s109 = ssub.s32 768, 768
      %110 = vsyncadd [#allocation4], %s109
      %s112 = sshll.u32 [#allocation9], 4
      %s113 = int_to_ptr.vmem [resolvable:$true] %s112
      %115 = dma.vmem_to_hbm [thread:$0]  %s113, 768, %s3, [#allocation4]
    $region29: #{tpu_custom_call.1} parent=1 // pred_fallthru
      _
    // Predicated region
    $region30: #{tpu_custom_call.1} parent=1 // pred_check
      _
    $region31: #{tpu_custom_call.1} parent=1 // pred_check_branch
      %117 = sbr.rel (0) target = $region33
    $region32: #{tpu_custom_call.1} parent=1 // pred_region
      %118 = dma.done [#allocation4], 768
    $region33: #{tpu_custom_call.1} parent=1 // pred_fallthru
      _
    %119 = vsyncpa [#allocation3], 1
    %120 = vsyncpa [#allocation4], 1
    %121 = vsyncpa [#allocation5], 1
    %122 = vsyncpa [#allocation6], 1

</llo_original>
